<compile_context>
chip_gen: v7x
topology: tpu7x:2x2x1
jax: 0.10.0
libtpu: 0.0.40
codegen_flags: <defaults>
</compile_context>

<pallas_src>
import functools

import jax
import jax.numpy as jnp
from jax.experimental import pallas as pl
from jax.experimental.pallas import tpu as pltpu

_LANE = 128


def _round_up(x, m):
    return (x + m - 1) // m * m


def _fused_model_kernel(x1_ref, x2_ref,
                        w1_ref, b1_ref,
                        w2_ref, b2_ref,
                        w3a_ref, w3b_ref, b3_ref,
                        o_ref):
    # --- net1: ReLU(x1 @ W1 + b1) -> (TILE_B, HP)   (MXU) ---
    y1 = jnp.dot(x1_ref[...], w1_ref[...], preferred_element_type=jnp.float32)
    y1 = jnp.maximum(y1 + b1_ref[...], 0.0)

    # --- net2: ReLU(x2 . w2 + b2) -> (TILE_B, 1)    (VPU/XLU, keeps MXU free) ---
    y2 = jnp.sum(x2_ref[...] * w2_ref[...], axis=-1, keepdims=True) + b2_ref[0, 0]
    y2 = jnp.maximum(y2, 0.0)

    # --- net3 on concat([y1, y2], 1), fused algebraically:
    #     cat(y1, y2) @ W3 == y1 @ W3[:H]  +  y2 * W3[H]   (rank-1 term on VPU) ---
    out = jnp.dot(y1, w3a_ref[...], preferred_element_type=jnp.float32)
    out = out + y2 * w3b_ref[...] + b3_ref[...]
    o_ref[...] = out.astype(o_ref.dtype)


@functools.partial(jax.jit, static_argnames=("tile_b",))
def fused_model(x1, x2, w1, b1, w2, b2, w3, b3, *, tile_b=512):
    B, D1 = x1.shape
    _, D2 = x2.shape
    H = w1.shape[1]
    O = w3.shape[1]

    # Pad feature dims to full lane width (128): zero-padded weight columns/rows
    # contribute exactly zero, so semantics are unchanged; the output pad is
    # sliced off below (all of this folds under jit).
    HP = _round_up(H, _LANE)
    OP = _round_up(O, _LANE)

    w1p = jnp.zeros((D1, HP), jnp.float32).at[:, :H].set(w1)
    b1p = jnp.zeros((1, HP), jnp.float32).at[:, :H].set(b1.reshape(1, H))
    w2r = w2.reshape(1, D2)                 # row vector for the VPU reduction
    b2s = b2.reshape(1, 1)                  # scalar -> SMEM
    w3ap = jnp.zeros((HP, OP), jnp.float32).at[:H, :O].set(w3[:H, :])
    w3bp = jnp.zeros((1, OP), jnp.float32).at[:, :O].set(w3[H:, :])
    b3p = jnp.zeros((1, OP), jnp.float32).at[:, :O].set(b3.reshape(1, O))

    # Batch tiling: TILE_B rows per grid step (multiple of 8); pad B up so the
    # grid divides evenly, slice the pad rows off afterwards.
    TILE_B = min(tile_b, _round_up(B, 8))
    BP = _round_up(B, TILE_B)
    if BP != B:
        x1 = jnp.zeros((BP, D1), x1.dtype).at[:B].set(x1)
        x2 = jnp.zeros((BP, D2), x2.dtype).at[:B].set(x2)
    grid = (BP // TILE_B,)

    batch_spec = lambda cols: pl.BlockSpec((TILE_B, cols), lambda i: (i, 0))
    resident = lambda shape: pl.BlockSpec(shape, lambda i: (0, 0))

    out = pl.pallas_call(
        _fused_model_kernel,
        out_shape=jax.ShapeDtypeStruct((BP, OP), jnp.float32),
        grid=grid,
        in_specs=[
            batch_spec(D1),                                      # x1 tile
            batch_spec(D2),                                      # x2 tile
            resident((D1, HP)),                                  # W1
            resident((1, HP)),                                   # b1
            resident((1, D2)),                                   # w2 row
            pl.BlockSpec(memory_space=pltpu.MemorySpace.SMEM),   # b2 scalar
            resident((HP, OP)),                                  # W3[:H]
            resident((1, OP)),                                   # W3[H]
            resident((1, OP)),                                   # b3
        ],
        out_specs=batch_spec(OP),
        compiler_params=pltpu.CompilerParams(
            dimension_semantics=("parallel",),   # shard batch tiles across TCs
            vmem_limit_bytes=32 * 1024 * 1024,
        ),
    )(x1, x2, w1p, b1p, w2r, b2s, w3ap, w3bp, b3p)

    return out[:B, :O]


def reference_model(x1, x2, w1, b1, w2, b2, w3, b3):
    y1 = jnp.maximum(x1 @ w1 + b1, 0.0)
    y2 = jnp.maximum(x2 @ w2 + b2, 0.0).reshape(-1, 1)
    return jnp.concatenate([y1, y2], axis=1) @ w3 + b3


if __name__ == "__main__":
    B, D1, D2, H, O = 64, 32, 16, 32, 16

    key = jax.random.PRNGKey(0)
    k = jax.random.split(key, 8)
    x1 = jax.random.normal(k[0], (B, D1), dtype=jnp.float32)
    x2 = jax.random.normal(k[1], (B, D2), dtype=jnp.float32)

    # Deterministic parameter init (shapes dictated by net1/net2/net3 choices).
    w1 = jax.random.normal(k[2], (D1, H), dtype=jnp.float32) * 0.1
    b1 = jax.random.normal(k[3], (H,), dtype=jnp.float32) * 0.1
    w2 = jax.random.normal(k[4], (D2, 1), dtype=jnp.float32) * 0.1
    b2 = jax.random.normal(k[5], (1,), dtype=jnp.float32) * 0.1
    w3 = jax.random.normal(k[6], (H + 1, O), dtype=jnp.float32) * 0.1
    b3 = jax.random.normal(k[7], (O,), dtype=jnp.float32) * 0.1

    out = fused_model(x1, x2, w1, b1, w2, b2, w3, b3)
    out = jax.block_until_ready(out)

    ref = reference_model(x1, x2, w1, b1, w2, b2, w3, b3)
    assert out.shape == (B, O)
    assert jnp.allclose(out, ref, atol=1e-4, rtol=1e-4), "mismatch vs JAX reference"

    print("KERNEL_OK")
</pallas_src>

<mosaic_0001>
module attributes {stable_mosaic.version = 11 : i64} {
  func.func @_fused_model_kernel(%arg0: i32, %arg1: memref<64x32xf32, #tpu.memory_space<vmem>>, %arg2: memref<64x16xf32, #tpu.memory_space<vmem>>, %arg3: memref<32x128xf32, #tpu.memory_space<vmem>>, %arg4: memref<1x128xf32, #tpu.memory_space<vmem>>, %arg5: memref<1x16xf32, #tpu.memory_space<vmem>>, %arg6: memref<1x1xf32, #tpu.memory_space<smem>>, %arg7: memref<128x128xf32, #tpu.memory_space<vmem>>, %arg8: memref<1x128xf32, #tpu.memory_space<vmem>>, %arg9: memref<1x128xf32, #tpu.memory_space<vmem>>, %arg10: memref<64x128xf32, #tpu.memory_space<vmem>>) attributes {dimension_semantics = [#tpu.dimension_semantics<parallel>], iteration_bounds = array<i64: 1>, scalar_prefetch = 0 : i64, scratch_operands = 0 : i64, tpu.core_type = #tpu.core_type<tc>, window_params = [{transform_indices = @transform_0, window_bounds = array<i64: 64, 32>}, {transform_indices = @transform_1, window_bounds = array<i64: 64, 16>}, {pipeline_mode = #tpu.pipeline_mode<synchronous>, transform_indices = @transform_2, window_bounds = array<i64: 32, 128>}, {pipeline_mode = #tpu.pipeline_mode<synchronous>, transform_indices = @transform_3, window_bounds = array<i64: 1, 128>}, {pipeline_mode = #tpu.pipeline_mode<synchronous>, transform_indices = @transform_4, window_bounds = array<i64: 1, 16>}, {transform_indices = @transform_5, window_bounds = array<i64: 1, 1>}, {pipeline_mode = #tpu.pipeline_mode<synchronous>, transform_indices = @transform_6, window_bounds = array<i64: 128, 128>}, {pipeline_mode = #tpu.pipeline_mode<synchronous>, transform_indices = @transform_7, window_bounds = array<i64: 1, 128>}, {pipeline_mode = #tpu.pipeline_mode<synchronous>, transform_indices = @transform_8, window_bounds = array<i64: 1, 128>}, {transform_indices = @transform_9, window_bounds = array<i64: 64, 128>}]} {
    %c0 = arith.constant 0 : index
    %c0_0 = arith.constant 0 : index
    %0 = vector.load %arg1[%c0, %c0_0] : memref<64x32xf32, #tpu.memory_space<vmem>>, vector<64x32xf32>
    %c0_1 = arith.constant 0 : index
    %c0_2 = arith.constant 0 : index
    %1 = vector.load %arg3[%c0_1, %c0_2] : memref<32x128xf32, #tpu.memory_space<vmem>>, vector<32x128xf32>
    %cst = arith.constant dense<0.000000e+00> : vector<64x128xf32>
    %2 = tpu.matmul %0, %1, %cst {dimension_numbers = #tpu.dot_dimension_numbers<[1], [0], [0], [1], [0, 0, 1, 1], [], []>} : vector<64x32xf32>, vector<32x128xf32>, vector<64x128xf32> -> vector<64x128xf32>
    %c0_3 = arith.constant 0 : index
    %c0_4 = arith.constant 0 : index
    %3 = vector.load %arg4[%c0_3, %c0_4] : memref<1x128xf32, #tpu.memory_space<vmem>>, vector<1x128xf32>
    %4 = vector.broadcast %3 : vector<1x128xf32> to vector<64x128xf32>
    %5 = arith.addf %2, %4 : vector<64x128xf32>
    %cst_5 = arith.constant 0.000000e+00 : f32
    %6 = vector.broadcast %cst_5 : f32 to vector<64x128xf32>
    %7 = arith.maximumf %5, %6 : vector<64x128xf32>
    %c0_6 = arith.constant 0 : index
    %c0_7 = arith.constant 0 : index
    %8 = vector.load %arg2[%c0_6, %c0_7] : memref<64x16xf32, #tpu.memory_space<vmem>>, vector<64x16xf32>
    %c0_8 = arith.constant 0 : index
    %c0_9 = arith.constant 0 : index
    %9 = vector.load %arg5[%c0_8, %c0_9] : memref<1x16xf32, #tpu.memory_space<vmem>>, vector<1x16xf32>
    %10 = vector.broadcast %9 : vector<1x16xf32> to vector<64x16xf32>
    %11 = arith.mulf %8, %10 : vector<64x16xf32>
    %cst_10 = arith.constant dense<0.000000e+00> : vector<64xf32>
    %12 = vector.multi_reduction <add>, %11, %cst_10 [1] : vector<64x16xf32> to vector<64xf32>
    %13 = vector.shape_cast %12 : vector<64xf32> to vector<64x1xf32>
    %c0_11 = arith.constant 0 : index
    %c0_12 = arith.constant 0 : index
    %14 = memref.load %arg6[%c0_11, %c0_12] : memref<1x1xf32, #tpu.memory_space<smem>>
    %15 = vector.broadcast %14 : f32 to vector<64x1xf32>
    %16 = arith.addf %13, %15 : vector<64x1xf32>
    %cst_13 = arith.constant 0.000000e+00 : f32
    %17 = vector.broadcast %cst_13 : f32 to vector<64x1xf32>
    %18 = arith.maximumf %16, %17 : vector<64x1xf32>
    %c0_14 = arith.constant 0 : index
    %c0_15 = arith.constant 0 : index
    %19 = vector.load %arg7[%c0_14, %c0_15] : memref<128x128xf32, #tpu.memory_space<vmem>>, vector<128x128xf32>
    %cst_16 = arith.constant dense<0.000000e+00> : vector<64x128xf32>
    %20 = tpu.matmul %7, %19, %cst_16 {dimension_numbers = #tpu.dot_dimension_numbers<[1], [0], [0], [1], [0, 0, 1, 1], [], []>} : vector<64x128xf32>, vector<128x128xf32>, vector<64x128xf32> -> vector<64x128xf32>
    %c0_17 = arith.constant 0 : index
    %c0_18 = arith.constant 0 : index
    %21 = vector.load %arg8[%c0_17, %c0_18] : memref<1x128xf32, #tpu.memory_space<vmem>>, vector<1x128xf32>
    %22 = vector.broadcast %18 : vector<64x1xf32> to vector<64x128xf32>
    %23 = vector.broadcast %21 : vector<1x128xf32> to vector<64x128xf32>
    %24 = arith.mulf %22, %23 : vector<64x128xf32>
    %25 = arith.addf %20, %24 : vector<64x128xf32>
    %c0_19 = arith.constant 0 : index
    %c0_20 = arith.constant 0 : index
    %26 = vector.load %arg9[%c0_19, %c0_20] : memref<1x128xf32, #tpu.memory_space<vmem>>, vector<1x128xf32>
    %27 = vector.broadcast %26 : vector<1x128xf32> to vector<64x128xf32>
    %28 = arith.addf %25, %27 : vector<64x128xf32>
    %c0_21 = arith.constant 0 : index
    %c0_22 = arith.constant 0 : index
    %29 = vector.load %arg10[%c0_21, %c0_22] : memref<64x128xf32, #tpu.memory_space<vmem>>, vector<64x128xf32>
    tpu.vector_store %arg10[%c0_21, %c0_22], %28 {strides = array<i32>} : memref<64x128xf32, #tpu.memory_space<vmem>>, vector<64x128xf32>,
    return
  }
  func.func @transform_0(%arg0: i32) -> (i32, i32) {
    %c0_i32 = arith.constant 0 : i32
    %c0_i32_0 = arith.constant 0 : i32
    return %arg0, %c0_i32 : i32, i32
  }
  func.func @transform_1(%arg0: i32) -> (i32, i32) {
    %c0_i32 = arith.constant 0 : i32
    %c0_i32_0 = arith.constant 0 : i32
    return %arg0, %c0_i32 : i32, i32
  }
  func.func @transform_2(%arg0: i32) -> (i32, i32) {
    %c0_i32 = arith.constant 0 : i32
    %c0_i32_0 = arith.constant 0 : i32
    %c0_i32_1 = arith.constant 0 : i32
    return %c0_i32, %c0_i32_0 : i32, i32
  }
  func.func @transform_3(%arg0: i32) -> (i32, i32) {
    %c0_i32 = arith.constant 0 : i32
    %c0_i32_0 = arith.constant 0 : i32
    %c0_i32_1 = arith.constant 0 : i32
    return %c0_i32, %c0_i32_0 : i32, i32
  }
  func.func @transform_4(%arg0: i32) -> (i32, i32) {
    %c0_i32 = arith.constant 0 : i32
    %c0_i32_0 = arith.constant 0 : i32
    %c0_i32_1 = arith.constant 0 : i32
    return %c0_i32, %c0_i32_0 : i32, i32
  }
  func.func @transform_5(%arg0: i32) -> (i32, i32) {
    %c0_i32 = arith.constant 0 : i32
    %c0_i32_0 = arith.constant 0 : i32
    %c0_i32_1 = arith.constant 0 : i32
    return %c0_i32, %c0_i32_0 : i32, i32
  }
  func.func @transform_6(%arg0: i32) -> (i32, i32) {
    %c0_i32 = arith.constant 0 : i32
    %c0_i32_0 = arith.constant 0 : i32
    %c0_i32_1 = arith.constant 0 : i32
    return %c0_i32, %c0_i32_0 : i32, i32
  }
  func.func @transform_7(%arg0: i32) -> (i32, i32) {
    %c0_i32 = arith.constant 0 : i32
    %c0_i32_0 = arith.constant 0 : i32
    %c0_i32_1 = arith.constant 0 : i32
    return %c0_i32, %c0_i32_0 : i32, i32
  }
  func.func @transform_8(%arg0: i32) -> (i32, i32) {
    %c0_i32 = arith.constant 0 : i32
    %c0_i32_0 = arith.constant 0 : i32
    %c0_i32_1 = arith.constant 0 : i32
    return %c0_i32, %c0_i32_0 : i32, i32
  }
  func.func @transform_9(%arg0: i32) -> (i32, i32) {
    %c0_i32 = arith.constant 0 : i32
    %c0_i32_0 = arith.constant 0 : i32
    return %arg0, %c0_i32 : i32, i32
  }
}

</mosaic_0001>

<llo_original>
// kernel: fused_model.1
$region0: #{fused_model.1}
  #allocation0 [shape = 'u32[]', space=smem, size = 0x4, offset = 0x4, fixed_abs, tag = 'smem constant byte address 0x4 - core index']
  #allocation1 [shape = 'u32[144,128]{1,0:T(1,128)}', space=vmem, size = 0x12000, scoped, tag = 'internal scratch']
  #allocation2 [shape = 'f32[1,1]{1,0:T(1,128)S(6)}', space=smem, size = 0x200, scoped, tag = 'scoped memory for fused_model.1']
  %s0 = inlined_call_operand.vmem [shape: f32[64,32], index: 0, kind: input, shape index: {}]
  %s1 = inlined_call_operand.vmem [shape: f32[64,16], index: 1, kind: input, shape index: {}]
  %s2 = inlined_call_operand.vmem [shape: f32[32,128], index: 2, kind: input, shape index: {}]
  %s3 = inlined_call_operand.vmem [shape: f32[1,128], index: 3, kind: input, shape index: {}]
  %s4 = inlined_call_operand.vmem [shape: f32[1,16], index: 4, kind: input, shape index: {}]
  %s5 = inlined_call_operand.<no memory space> [shape: f32[1,1], index: 5, kind: input, shape index: {}]
  %s6 = inlined_call_operand.vmem [shape: f32[128,128], index: 6, kind: input, shape index: {}]
  %s7 = inlined_call_operand.vmem [shape: f32[1,128], index: 7, kind: input, shape index: {}]
  %s8 = inlined_call_operand.vmem [shape: f32[1,128], index: 8, kind: input, shape index: {}]
  %s9 = inlined_call_operand.vmem [shape: f32[64,128], index: 9, kind: output, shape index: {}]
  %s10 = sld [smem:[#allocation0]]
  $region46: #{fused_model.1} parent=0
    _
  %s12 = ssub.s32 1, %s10
  %s13 = scalar_select 0, %s12, %s10
  %14 = sst [smem:[#allocation2]] %s5
  // Predicated region
  $region2: #{fused_model.1} parent=0 // pred_check
    _
  $region3: #{fused_model.1} parent=0 // pred_check_branch
    %16 = sbr.rel (0) target = $region5
  $region4: #{fused_model.1} parent=0 // pred_region
    _
  $region5: #{fused_model.1} parent=0 // pred_fallthru
    _
  // Predicated region
  $region6: #{fused_model.1} parent=0 // pred_check
    _
  $region7: #{fused_model.1} parent=0 // pred_check_branch
    %18 = sbr.rel (0) target = $region9
  $region8: #{fused_model.1} parent=0 // pred_region
    _
  $region9: #{fused_model.1} parent=0 // pred_fallthru
    _
  // Predicated region
  $region10: #{fused_model.1} parent=0 // pred_check
    _
  $region11: #{fused_model.1} parent=0 // pred_check_branch
    %20 = sbr.rel (0) target = $region13
  $region12: #{fused_model.1} parent=0 // pred_region
    _
  $region13: #{fused_model.1} parent=0 // pred_fallthru
    _
  // Predicated region
  $region14: #{fused_model.1} parent=0 // pred_check
    _
  $region15: #{fused_model.1} parent=0 // pred_check_branch
    %22 = sbr.rel (0) target = $region17
  $region16: #{fused_model.1} parent=0 // pred_region
    _
  $region17: #{fused_model.1} parent=0 // pred_fallthru
    _
  // Predicated region
  $region18: #{fused_model.1} parent=0 // pred_check
    _
  $region19: #{fused_model.1} parent=0 // pred_check_branch
    %24 = sbr.rel (0) target = $region21
  $region20: #{fused_model.1} parent=0 // pred_region
    _
  $region21: #{fused_model.1} parent=0 // pred_fallthru
    _
  // Predicated region
  $region22: #{fused_model.1} parent=0 // pred_check
    _
  $region23: #{fused_model.1} parent=0 // pred_check_branch
    %26 = sbr.rel (0) target = $region25
  $region24: #{fused_model.1} parent=0 // pred_region
    _
  $region25: #{fused_model.1} parent=0 // pred_fallthru
    _
  // Predicated region
  $region26: #{fused_model.1} parent=0 // pred_check
    _
  $region27: #{fused_model.1} parent=0 // pred_check_branch
    %28 = sbr.rel (0) target = $region29
  $region28: #{fused_model.1} parent=0 // pred_region
    _
  $region29: #{fused_model.1} parent=0 // pred_fallthru
    _
  // Predicated region
  $region30: #{fused_model.1} parent=0 // pred_check
    _
  $region31: #{fused_model.1} parent=0 // pred_check_branch
    %30 = sbr.rel (0) target = $region33
  $region32: #{fused_model.1} parent=0 // pred_region
    _
  $region33: #{fused_model.1} parent=0 // pred_fallthru
    _
  // Predicated region
  $region34: #{fused_model.1} parent=0 // pred_check
    _
  $region35: #{fused_model.1} parent=0 // pred_check_branch
    %32 = sbr.rel (0) target = $region37
  $region36: #{fused_model.1} parent=0 // pred_region
    _
  $region37: #{fused_model.1} parent=0 // pred_fallthru
    _
  %v33 = vld [vmem:[%s0] sm:$0xff]
  %v34 = vld [vmem:[%s0 + $0x8] sm:$0xff]
  %v35 = vld [vmem:[%s0 + $0x10] sm:$0xff]
  %v36 = vld [vmem:[%s0 + $0x18] sm:$0xff]
  %v37 = vld [vmem:[%s0 + $0x20] sm:$0xff]
  %v38 = vld [vmem:[%s0 + $0x28] sm:$0xff]
  %v39 = vld [vmem:[%s0 + $0x30] sm:$0xff]
  %v40 = vld [vmem:[%s0 + $0x38] sm:$0xff]
  %v41 = vld [vmem:[%s2] sm:$0xff]
  %v42 = vld [vmem:[%s2 + $0x8] sm:$0xff]
  %v43 = vld [vmem:[%s2 + $0x10] sm:$0xff]
  %v44 = vld [vmem:[%s2 + $0x18] sm:$0xff]
  %v45 = vld [vmem:[%s3] sm:$0x1]
  %v47 = vlaneseq
  %v48 = vshrl.u32 %v47, 7
  %v49 = vsub.s32 0, %v48
  %v50 = vrot.slane %v45, %v49
  %vm52 = vcmask 261120
  %v54 = vsel %vm52, %v33, 0
  %v57 = vsel %vm52, %v34, 0
  %v60 = vsel %vm52, %v35, 0
  %v63 = vsel %vm52, %v36, 0
  %v66 = vsel %vm52, %v37, 0
  %v69 = vsel %vm52, %v38, 0
  %v72 = vsel %vm52, %v39, 0
  %v75 = vsel %vm52, %v40, 0
  %77 = vmatprep.subr.mxu0 0.0
  %78 = vmatpush1.msra.mxu0 %v41
  %79 = vmatprep.subr.mxu0 0.0
  %80 = vmatpush1.msra.mxu0 %v42
  %81 = vmatprep.subr.mxu0 0.0
  %82 = vmatpush1.msra.mxu0 %v43
  %83 = vmatprep.subr.mxu0 0.0
  %84 = vmatpush1.msra.mxu0 %v44
  %85 = vmatprep.subr.mxu0 0.0
  %86 = vmatpush1.msra.mxu0 0.0
  %87 = vmatprep.subr.mxu0 0.0
  %88 = vmatpush1.msra.mxu0 0.0
  %89 = vmatprep.subr.mxu0 0.0
  %90 = vmatpush1.msra.mxu0 0.0
  %91 = vmatprep.subr.mxu0 0.0
  %92 = vmatpush1.msra.mxu0 0.0
  %93 = vmatprep.subr.mxu0 0.0
  %94 = vmatpush1.msra.mxu0 0.0
  %95 = vmatprep.subr.mxu0 0.0
  %96 = vmatpush1.msra.mxu0 0.0
  %97 = vmatprep.subr.mxu0 0.0
  %98 = vmatpush1.msra.mxu0 0.0
  %99 = vmatprep.subr.mxu0 0.0
  %100 = vmatpush1.msra.mxu0 0.0
  %101 = vmatprep.subr.mxu0 0.0
  %102 = vmatpush1.msra.mxu0 0.0
  %103 = vmatprep.subr.mxu0 0.0
  %104 = vmatpush1.msra.mxu0 0.0
  %105 = vmatprep.subr.mxu0 0.0
  %106 = vmatpush1.msra.mxu0 0.0
  %107 = vmatprep.subr.mxu0 0.0
  %108 = vmatpush1.msra.mxu0 0.0
  %109 = vmatprep.subr.mxu0 0.0
  %110 = vmatpush1.msra.mxu0 0.0
  %111 = vmatprep.subr.mxu0 0.0
  %112 = vmatpush1.msra.mxu0 0.0
  %113 = vmatprep.subr.mxu0 0.0
  %114 = vmatpush1.msra.mxu0 0.0
  %115 = vmatprep.subr.mxu0 0.0
  %116 = vmatpush1.msra.mxu0 0.0
  %117 = vmatprep.subr.mxu0 0.0
  %118 = vmatpush1.msra.mxu0 0.0
  %119 = vmatprep.subr.mxu0 0.0
  %120 = vmatpush1.msra.mxu0 0.0
  %121 = vmatprep.subr.mxu0 0.0
  %122 = vmatpush1.msra.mxu0 0.0
  %123 = vmatprep.subr.mxu0 0.0
  %124 = vmatpush1.msra.mxu0 0.0
  %125 = vmatprep.subr.mxu0 0.0
  %126 = vmatpush1.msra.mxu0 0.0
  %127 = vmatprep.subr.mxu0 0.0
  %128 = vmatpush1.msra.mxu0 0.0
  %129 = vmatprep.subr.mxu0 0.0
  %130 = vmatpush1.msra.mxu0 0.0
  %131 = vmatprep.subr.mxu0 0.0
  %132 = vmatpush1.msra.mxu0 0.0
  %133 = vmatprep.subr.mxu0 0.0
  %134 = vmatpush1.msra.mxu0 0.0
  %135 = vmatprep.subr.mxu0 0.0
  %136 = vmatpush1.msra.mxu0 0.0
  %137 = vmatprep.subr.mxu0 0.0
  %138 = vmatpush1.msra.mxu0 0.0
  %139 = vmatprep.subr.mxu0 0.0
  %140 = vmatpush1.msra.mxu0 0.0
  %141 = vmatprep.mubr.f32.mxu0 0.0
  %142 = vmatmul.mubr.f32.gmra.mrb[0].mxu0 %v54
  %v143 = vpop.f32.mrb[0].mxu0
  %v144 = vadd.f32 %v50, %v143
  %v145 = vpop.f32.mrb[0].mxu0
  %146 = vmatprep.mubr.f32.mxu0 0.0
  %147 = vmatmul.mubr.f32.gmra.mrb[0].mxu0 %v57
  %v148 = vpop.f32.mrb[0].mxu0
  %v149 = vadd.f32 %v50, %v148
  %v150 = vpop.f32.mrb[0].mxu0
  %151 = vmatprep.mubr.f32.mxu0 0.0
  %152 = vmatmul.mubr.f32.gmra.mrb[0].mxu0 %v60
  %v153 = vpop.f32.mrb[0].mxu0
  %v154 = vadd.f32 %v50, %v153
  %v155 = vpop.f32.mrb[0].mxu0
  %156 = vmatprep.mubr.f32.mxu0 0.0
  %157 = vmatmul.mubr.f32.gmra.mrb[0].mxu0 %v63
  %v158 = vpop.f32.mrb[0].mxu0
  %v159 = vadd.f32 %v50, %v158
  %v160 = vpop.f32.mrb[0].mxu0
  %161 = vmatprep.mubr.f32.mxu0 0.0
  %162 = vmatmul.mubr.f32.gmra.mrb[0].mxu0 %v66
  %v163 = vpop.f32.mrb[0].mxu0
  %v164 = vadd.f32 %v50, %v163
  %v165 = vpop.f32.mrb[0].mxu0
  %166 = vmatprep.mubr.f32.mxu0 0.0
  %167 = vmatmul.mubr.f32.gmra.mrb[0].mxu0 %v69
  %v168 = vpop.f32.mrb[0].mxu0
  %v169 = vadd.f32 %v50, %v168
  %v170 = vpop.f32.mrb[0].mxu0
  %171 = vmatprep.mubr.f32.mxu0 0.0
  %172 = vmatmul.mubr.f32.gmra.mrb[0].mxu0 %v72
  %v173 = vpop.f32.mrb[0].mxu0
  %v174 = vadd.f32 %v50, %v173
  %v175 = vpop.f32.mrb[0].mxu0
  %176 = vmatprep.mubr.f32.mxu0 0.0
  %177 = vmatmul.mubr.f32.gmra.mrb[0].mxu0 %v75
  %v178 = vpop.f32.mrb[0].mxu0
  %v179 = vadd.f32 %v50, %v178
  %v180 = vpop.f32.mrb[0].mxu0
  %181 = vdwg.mxu0
  %v182 = vmax.f32 %v144, 0.0
  %v183 = vmax.f32 %v149, 0.0
  %v184 = vmax.f32 %v154, 0.0
  %v185 = vmax.f32 %v159, 0.0
  %v186 = vmax.f32 %v164, 0.0
  %v187 = vmax.f32 %v169, 0.0
  %v188 = vmax.f32 %v174, 0.0
  %v189 = vmax.f32 %v179, 0.0
  %v190 = vld [vmem:[%s1] sm:$0xff]
  %v191 = vld [vmem:[%s1 + $0x8] sm:$0xff]
  %v192 = vld [vmem:[%s1 + $0x10] sm:$0xff]
  %v193 = vld [vmem:[%s1 + $0x18] sm:$0xff]
  %v194 = vld [vmem:[%s1 + $0x20] sm:$0xff]
  %v195 = vld [vmem:[%s1 + $0x28] sm:$0xff]
  %v196 = vld [vmem:[%s1 + $0x30] sm:$0xff]
  %v197 = vld [vmem:[%s1 + $0x38] sm:$0xff]
  %v198 = vld [vmem:[%s4] sm:$0x1]
  %v200 = vlaneseq
  %v201 = vshrl.u32 %v200, 7
  %v202 = vsub.s32 0, %v201
  %v203 = vrot.slane %v198, %v202
  %v205 = vmul.f32 %v190, %v203
  %v206 = vmul.f32 %v191, %v203
  %v207 = vmul.f32 %v192, %v203
  %v208 = vmul.f32 %v193, %v203
  %v209 = vmul.f32 %v194, %v203
  %v210 = vmul.f32 %v195, %v203
  %v211 = vmul.f32 %v196, %v203
  %v212 = vmul.f32 %v197, %v203
  %vm213 = vcmask 130048
  %v214 = vsel %vm213, %v205, 0.0
  %215 = vadd.xlane.f32.xlu0 %v214
  %v216 = vpop.xlane.xlu0 %215
  %v217 = vsel %vm213, %v206, 0.0
  %218 = vadd.xlane.f32.xlu0 %v217
  %v219 = vpop.xlane.xlu0 %218
  %v220 = vsel %vm213, %v207, 0.0
  %221 = vadd.xlane.f32.xlu0 %v220
  %v222 = vpop.xlane.xlu0 %221
  %v223 = vsel %vm213, %v208, 0.0
  %224 = vadd.xlane.f32.xlu0 %v223
  %v225 = vpop.xlane.xlu0 %224
  %v226 = vsel %vm213, %v209, 0.0
  %227 = vadd.xlane.f32.xlu0 %v226
  %v228 = vpop.xlane.xlu0 %227
  %v229 = vsel %vm213, %v210, 0.0
  %230 = vadd.xlane.f32.xlu0 %v229
  %v231 = vpop.xlane.xlu0 %230
  %v232 = vsel %vm213, %v211, 0.0
  %233 = vadd.xlane.f32.xlu0 %v232
  %v234 = vpop.xlane.xlu0 %233
  %v235 = vsel %vm213, %v212, 0.0
  %236 = vadd.xlane.f32.xlu0 %v235
  %v237 = vpop.xlane.xlu0 %236
  %s238 = sld [smem:[#allocation2]]
  %v239 = vstv %s238
  %v240 = vadd.f32 %v216, %v239
  %v241 = vadd.f32 %v219, %v239
  %v242 = vadd.f32 %v222, %v239
  %v243 = vadd.f32 %v225, %v239
  %v244 = vadd.f32 %v228, %v239
  %v245 = vadd.f32 %v231, %v239
  %v246 = vadd.f32 %v234, %v239
  %v247 = vadd.f32 %v237, %v239
  %v248 = vmax.f32 %v240, 0.0
  %v249 = vmax.f32 %v241, 0.0
  %v250 = vmax.f32 %v242, 0.0
  %v251 = vmax.f32 %v243, 0.0
  %v252 = vmax.f32 %v244, 0.0
  %v253 = vmax.f32 %v245, 0.0
  %v254 = vmax.f32 %v246, 0.0
  %v255 = vmax.f32 %v247, 0.0
  %v256 = vld [vmem:[%s6] sm:$0xff]
  %v257 = vld [vmem:[%s6 + $0x8] sm:$0xff]
  %v258 = vld [vmem:[%s6 + $0x10] sm:$0xff]
  %v259 = vld [vmem:[%s6 + $0x18] sm:$0xff]
  %v260 = vld [vmem:[%s6 + $0x20] sm:$0xff]
  %v261 = vld [vmem:[%s6 + $0x28] sm:$0xff]
  %v262 = vld [vmem:[%s6 + $0x30] sm:$0xff]
  %v263 = vld [vmem:[%s6 + $0x38] sm:$0xff]
  %v264 = vld [vmem:[%s6 + $0x40] sm:$0xff]
  %v265 = vld [vmem:[%s6 + $0x48] sm:$0xff]
  %v266 = vld [vmem:[%s6 + $0x50] sm:$0xff]
  %v267 = vld [vmem:[%s6 + $0x58] sm:$0xff]
  %v268 = vld [vmem:[%s6 + $0x60] sm:$0xff]
  %v269 = vld [vmem:[%s6 + $0x68] sm:$0xff]
  %v270 = vld [vmem:[%s6 + $0x70] sm:$0xff]
  %v271 = vld [vmem:[%s6 + $0x78] sm:$0xff]
  %v272 = vld [vmem:[%s7] sm:$0x1]
  %v274 = vlaneseq
  %v275 = vshrl.u32 %v274, 7
  %v276 = vsub.s32 0, %v275
  %v277 = vrot.slane %v272, %v276
  %v279 = vmul.f32 %v248, %v277
  %v280 = vmul.f32 %v249, %v277
  %v281 = vmul.f32 %v250, %v277
  %v282 = vmul.f32 %v251, %v277
  %v283 = vmul.f32 %v252, %v277
  %v284 = vmul.f32 %v253, %v277
  %v285 = vmul.f32 %v254, %v277
  %v286 = vmul.f32 %v255, %v277
  %287 = vmatprep.subr.mxu0 0.0
  %288 = vmatpush1.msra.mxu0 %v256
  %289 = vmatprep.subr.mxu0 0.0
  %290 = vmatpush1.msra.mxu0 %v257
  %291 = vmatprep.subr.mxu0 0.0
  %292 = vmatpush1.msra.mxu0 %v258
  %293 = vmatprep.subr.mxu0 0.0
  %294 = vmatpush1.msra.mxu0 %v259
  %295 = vmatprep.subr.mxu0 0.0
  %296 = vmatpush1.msra.mxu0 %v260
  %297 = vmatprep.subr.mxu0 0.0
  %298 = vmatpush1.msra.mxu0 %v261
  %299 = vmatprep.subr.mxu0 0.0
  %300 = vmatpush1.msra.mxu0 %v262
  %301 = vmatprep.subr.mxu0 0.0
  %302 = vmatpush1.msra.mxu0 %v263
  %303 = vmatprep.subr.mxu0 0.0
  %304 = vmatpush1.msra.mxu0 %v264
  %305 = vmatprep.subr.mxu0 0.0
  %306 = vmatpush1.msra.mxu0 %v265
  %307 = vmatprep.subr.mxu0 0.0
  %308 = vmatpush1.msra.mxu0 %v266
  %309 = vmatprep.subr.mxu0 0.0
  %310 = vmatpush1.msra.mxu0 %v267
  %311 = vmatprep.subr.mxu0 0.0
  %312 = vmatpush1.msra.mxu0 %v268
  %313 = vmatprep.subr.mxu0 0.0
  %314 = vmatpush1.msra.mxu0 %v269
  %315 = vmatprep.subr.mxu0 0.0
  %316 = vmatpush1.msra.mxu0 %v270
  %317 = vmatprep.subr.mxu0 0.0
  %318 = vmatpush1.msra.mxu0 %v271
  %319 = vmatprep.subr.mxu0 0.0
  %320 = vmatpush1.msra.mxu0 0.0
  %321 = vmatprep.subr.mxu0 0.0
  %322 = vmatpush1.msra.mxu0 0.0
  %323 = vmatprep.subr.mxu0 0.0
  %324 = vmatpush1.msra.mxu0 0.0
  %325 = vmatprep.subr.mxu0 0.0
  %326 = vmatpush1.msra.mxu0 0.0
  %327 = vmatprep.subr.mxu0 0.0
  %328 = vmatpush1.msra.mxu0 0.0
  %329 = vmatprep.subr.mxu0 0.0
  %330 = vmatpush1.msra.mxu0 0.0
  %331 = vmatprep.subr.mxu0 0.0
  %332 = vmatpush1.msra.mxu0 0.0
  %333 = vmatprep.subr.mxu0 0.0
  %334 = vmatpush1.msra.mxu0 0.0
  %335 = vmatprep.subr.mxu0 0.0
  %336 = vmatpush1.msra.mxu0 0.0
  %337 = vmatprep.subr.mxu0 0.0
  %338 = vmatpush1.msra.mxu0 0.0
  %339 = vmatprep.subr.mxu0 0.0
  %340 = vmatpush1.msra.mxu0 0.0
  %341 = vmatprep.subr.mxu0 0.0
  %342 = vmatpush1.msra.mxu0 0.0
  %343 = vmatprep.subr.mxu0 0.0
  %344 = vmatpush1.msra.mxu0 0.0
  %345 = vmatprep.subr.mxu0 0.0
  %346 = vmatpush1.msra.mxu0 0.0
  %347 = vmatprep.subr.mxu0 0.0
  %348 = vmatpush1.msra.mxu0 0.0
  %349 = vmatprep.subr.mxu0 0.0
  %350 = vmatpush1.msra.mxu0 0.0
  %351 = vmatprep.mubr.f32.mxu0 0.0
  %352 = vmatmul.mubr.f32.gmra.mrb[0].mxu0 %v182
  %v353 = vpop.f32.mrb[0].mxu0
  %v354 = vadd.f32 %v279, %v353
  %v355 = vpop.f32.mrb[0].mxu0
  %356 = vmatprep.mubr.f32.mxu0 0.0
  %357 = vmatmul.mubr.f32.gmra.mrb[0].mxu0 %v183
  %v358 = vpop.f32.mrb[0].mxu0
  %v359 = vadd.f32 %v280, %v358
  %v360 = vpop.f32.mrb[0].mxu0
  %361 = vmatprep.mubr.f32.mxu0 0.0
  %362 = vmatmul.mubr.f32.gmra.mrb[0].mxu0 %v184
  %v363 = vpop.f32.mrb[0].mxu0
  %v364 = vadd.f32 %v281, %v363
  %v365 = vpop.f32.mrb[0].mxu0
  %366 = vmatprep.mubr.f32.mxu0 0.0
  %367 = vmatmul.mubr.f32.gmra.mrb[0].mxu0 %v185
  %v368 = vpop.f32.mrb[0].mxu0
  %v369 = vadd.f32 %v282, %v368
  %v370 = vpop.f32.mrb[0].mxu0
  %371 = vmatprep.mubr.f32.mxu0 0.0
  %372 = vmatmul.mubr.f32.gmra.mrb[0].mxu0 %v186
  %v373 = vpop.f32.mrb[0].mxu0
  %v374 = vadd.f32 %v283, %v373
  %v375 = vpop.f32.mrb[0].mxu0
  %376 = vmatprep.mubr.f32.mxu0 0.0
  %377 = vmatmul.mubr.f32.gmra.mrb[0].mxu0 %v187
  %v378 = vpop.f32.mrb[0].mxu0
  %v379 = vadd.f32 %v284, %v378
  %v380 = vpop.f32.mrb[0].mxu0
  %381 = vmatprep.mubr.f32.mxu0 0.0
  %382 = vmatmul.mubr.f32.gmra.mrb[0].mxu0 %v188
  %v383 = vpop.f32.mrb[0].mxu0
  %v384 = vadd.f32 %v285, %v383
  %v385 = vpop.f32.mrb[0].mxu0
  %386 = vmatprep.mubr.f32.mxu0 0.0
  %387 = vmatmul.mubr.f32.gmra.mrb[0].mxu0 %v189
  %v388 = vpop.f32.mrb[0].mxu0
  %v389 = vadd.f32 %v286, %v388
  %v390 = vpop.f32.mrb[0].mxu0
  %391 = vdwg.mxu0
  %v392 = vld [vmem:[%s8] sm:$0x1]
  %v394 = vlaneseq
  %v395 = vshrl.u32 %v394, 7
  %v396 = vsub.s32 0, %v395
  %v397 = vrot.slane %v392, %v396
  %v399 = vadd.f32 %v354, %v397
  %v400 = vadd.f32 %v359, %v397
  %v401 = vadd.f32 %v364, %v397
  %v402 = vadd.f32 %v369, %v397
  %v403 = vadd.f32 %v374, %v397
  %v404 = vadd.f32 %v379, %v397
  %v405 = vadd.f32 %v384, %v397
  %v406 = vadd.f32 %v389, %v397
  %407 = vst [vmem:[%s9] sm:$0xff] %v399
  %408 = vst [vmem:[%s9 + $0x8] sm:$0xff] %v400
  %409 = vst [vmem:[%s9 + $0x10] sm:$0xff] %v401
  %410 = vst [vmem:[%s9 + $0x18] sm:$0xff] %v402
  %411 = vst [vmem:[%s9 + $0x20] sm:$0xff] %v403
  %412 = vst [vmem:[%s9 + $0x28] sm:$0xff] %v404
  %413 = vst [vmem:[%s9 + $0x30] sm:$0xff] %v405
  %414 = vst [vmem:[%s9 + $0x38] sm:$0xff] %v406
  // Predicated region
  $region38: #{fused_model.1} parent=0 // pred_check
    _
  $region39: #{fused_model.1} parent=0 // pred_check_branch
    %416 = sbr.rel (0) target = $region41
  $region40: #{fused_model.1} parent=0 // pred_region
    _
  $region41: #{fused_model.1} parent=0 // pred_fallthru
    _
  // Predicated region
  $region42: #{fused_model.1} parent=0 // pred_check
    _
  $region43: #{fused_model.1} parent=0 // pred_check_branch
    %418 = sbr.rel (0) target = $region45
  $region44: #{fused_model.1} parent=0 // pred_region
    _
  $region45: #{fused_model.1} parent=0 // pred_fallthru
    _

</llo_original>
